<compile_context>
chip_gen: v7x
topology: tpu7x:2x2x1
jax: 0.10.0
libtpu: 0.0.40
codegen_flags: <defaults>
</compile_context>

<pallas_src>
import functools

import jax
import jax.numpy as jnp
from jax import lax
from jax.experimental import pallas as pl
from jax.experimental.pallas import tpu as pltpu


def _round_up(x, m):
    return ((x + m - 1) // m) * m


# ----------------------------------------------------------------------------
# Pallas kernels
# ----------------------------------------------------------------------------
def _fused_kernel(p_ref, w_ref, b_ref, o_ref):
    # Single MXU pass: [tm, K] @ [K, E] -> [tm, E], f32 accumulate, f32 bias.
    acc = jnp.dot(p_ref[...], w_ref[...], preferred_element_type=jnp.float32)
    o_ref[...] = acc + b_ref[...]                       # broadcast [1, E]


def _unfused_kernel(p_ref, wc_ref, bc_ref, wp_ref, bp_ref, o_ref, *, slab):
    # Two-GEMM path (shape a real nonlinear backbone would need), processed in
    # row slabs so the f32 intermediate stays register-resident even at big tm.
    n_slabs = p_ref.shape[0] // slab

    def body(s, carry):
        r0 = pl.multiple_of(s * slab, slab)
        rows = pl.ds(r0, slab)
        # conv-as-GEMM: [slab, K] @ [K, Cf] -> [slab, Cf]
        feat = jnp.dot(p_ref[rows, :], wc_ref[...],
                       preferred_element_type=jnp.float32)
        feat = feat + bc_ref[...]
        # TODO(synk): a real backbone's nonlinearity would go here.
        # nn.Linear projection: [slab, Cf] @ [Cf, E] -> [slab, E]
        proj = jnp.dot(feat.astype(wp_ref.dtype), wp_ref[...],
                       preferred_element_type=jnp.float32)
        o_ref[rows, :] = proj + bp_ref[...]
        return carry

    lax.fori_loop(0, n_slabs, body, 0, unroll=True)


# ----------------------------------------------------------------------------
# Wrapper
# ----------------------------------------------------------------------------
@functools.partial(
    jax.jit,
    static_argnames=("stride", "pad", "tm", "fuse_gemms", "compute_dtype"))
def hybrid_embed_forward(x, wconv, bconv, wproj, bproj, *, stride=2, pad=1,
                         tm=1024, fuse_gemms=True, compute_dtype=jnp.bfloat16):
    """x: [B, C, H, W] float32 (NCHW).  Returns [B, Hf*Wf, E] float32."""
    B, C, H, W = x.shape
    Cf, _, Kh, Kw = wconv.shape            # PyTorch Conv2d weight (Cout, Cin, Kh, Kw)
    E, _ = wproj.shape                     # PyTorch Linear weight (E, Cf)

    Hf = (H + 2 * pad - Kh) // stride + 1
    Wf = (W + 2 * pad - Kw) // stride + 1
    K = C * Kh * Kw
    M = B * Hf * Wf

    # ---- glue: single-pass im2col.  Cast to compute dtype first, request a
    # channel-last output so no transpose copy is needed.  Channel ordering
    # inside K is (c, kh, kw), matching PyTorch's wconv.reshape(Cf, C*Kh*Kw).
    patches = lax.conv_general_dilated_patches(
        x.astype(compute_dtype), (Kh, Kw), (stride, stride),
        ((pad, pad), (pad, pad)),
        dimension_numbers=("NCHW", "OIHW", "NHWC"))       # (B, Hf, Wf, K)
    patches = patches.reshape(M, K)                       # contiguous, no copy

    # ---- tiling: only M is padded.  K / Cf / E stay unpadded in HBM (block
    # last dim == full array dim is legal), minimizing streamed bytes.
    tm_r = _round_up(tm, 128)
    M128 = _round_up(M, 128)
    tm_eff = min(tm_r, M128)
    if M128 >= 256 and tm_eff == M128:
        # keep >= 2 grid steps so v7x's two TensorCores both get work
        tm_eff = _round_up((M128 + 1) // 2, 128)
    M_pad = _round_up(M, tm_eff)
    if M_pad > M:
        patches = jnp.pad(patches, ((0, M_pad - M), (0, 0)))

    grid = (M_pad // tm_eff,)
    out_shape = jax.ShapeDtypeStruct((M_pad, E), jnp.float32)
    cparams = pltpu.CompilerParams(dimension_semantics=("parallel",))
    p_spec = pl.BlockSpec((tm_eff, K), lambda i: (i, 0))
    out_spec = pl.BlockSpec((tm_eff, E), lambda i: (i, 0))

    wconv_mat = wconv.reshape(Cf, K).T         # [K, Cf] f32
    wproj_t = wproj.T                          # [Cf, E] f32

    if fuse_gemms:
        # Backbone is linear -> fold both GEMMs + biases into one (product in
        # f32, single cast of the fused weight to bf16).
        wfused = (wconv_mat @ wproj_t).astype(compute_dtype)          # [K, E]
        bfused = (bconv @ wproj_t + bproj).reshape(1, E).astype(jnp.float32)
        out_flat = pl.pallas_call(
            _fused_kernel,
            out_shape=out_shape,
            grid=grid,
            in_specs=[
                p_spec,
                pl.BlockSpec((K, E), lambda i: (0, 0)),
                pl.BlockSpec((1, E), lambda i: (0, 0)),
            ],
            out_specs=out_spec,
            compiler_params=cparams,
        )(patches, wfused, bfused)
    else:
        slab = 128 if tm_eff % 256 else 256
        wc = wconv_mat.astype(compute_dtype)                          # [K, Cf]
        bc = bconv.reshape(1, Cf).astype(jnp.float32)
        wp = wproj_t.astype(compute_dtype)                            # [Cf, E]
        bp = bproj.reshape(1, E).astype(jnp.float32)
        out_flat = pl.pallas_call(
            functools.partial(_unfused_kernel, slab=slab),
            out_shape=out_shape,
            grid=grid,
            in_specs=[
                p_spec,
                pl.BlockSpec((K, Cf), lambda i: (0, 0)),
                pl.BlockSpec((1, Cf), lambda i: (0, 0)),
                pl.BlockSpec((Cf, E), lambda i: (0, 0)),
                pl.BlockSpec((1, E), lambda i: (0, 0)),
            ],
            out_specs=out_spec,
            compiler_params=cparams,
        )(patches, wc, bc, wp, bp)

    # x.flatten(2).transpose(1, 2) semantics: tokens ordered (b, h, w).
    return out_flat[:M].reshape(B, Hf * Wf, E)


# ----------------------------------------------------------------------------
# Pure-JAX reference (matches the PyTorch forward semantics, f32 throughout)
# ----------------------------------------------------------------------------
def reference_forward(x, wconv, bconv, wproj, bproj, *, stride=2, pad=1):
    feat = lax.conv_general_dilated(
        x, wconv, window_strides=(stride, stride),
        padding=((pad, pad), (pad, pad)),
        dimension_numbers=("NCHW", "OIHW", "NCHW"))
    feat = feat + bconv[None, :, None, None]
    B, Cf, Hf, Wf = feat.shape
    tok = feat.reshape(B, Cf, Hf * Wf).transpose(0, 2, 1)   # flatten(2).transpose(1,2)
    return tok @ wproj.T + bproj[None, None, :]


if __name__ == "__main__":
    # Small shapes consistent with the module.
    B, C, H, W = 2, 4, 16, 16       # input  [B, in_chans, H, W]
    Cf = 32                         # backbone feature_dim
    E = 32                          # embed_dim
    Kh = Kw = 3

    key = jax.random.PRNGKey(0)
    k1, k2, k3, k4, k5 = jax.random.split(key, 5)

    x = jax.random.normal(k1, (B, C, H, W), dtype=jnp.float32)
    wconv = 0.1 * jax.random.normal(k2, (Cf, C, Kh, Kw), dtype=jnp.float32)
    bconv = 0.1 * jax.random.normal(k3, (Cf,), dtype=jnp.float32)
    wproj = 0.1 * jax.random.normal(k4, (E, Cf), dtype=jnp.float32)
    bproj = 0.1 * jax.random.normal(k5, (E,), dtype=jnp.float32)

    ref = reference_forward(x, wconv, bconv, wproj, bproj)

    # Fused (single-GEMM) path — valid because the stand-in backbone is linear.
    out_fused = jax.block_until_ready(
        hybrid_embed_forward(x, wconv, bconv, wproj, bproj, fuse_gemms=True))
    # Unfused (two-GEMM) path — the shape a nonlinear backbone would use.
    out_unfused = jax.block_until_ready(
        hybrid_embed_forward(x, wconv, bconv, wproj, bproj, fuse_gemms=False))

    expected_shape = (B, (H // 2) * (W // 2), E)
    assert out_fused.shape == expected_shape, out_fused.shape
    assert out_unfused.shape == expected_shape, out_unfused.shape
    # bf16 operands / f32 accumulation -> relaxed tolerance vs. pure-f32 ref.
    assert jnp.allclose(out_fused, ref, rtol=2e-2, atol=2e-2), \
        float(jnp.max(jnp.abs(out_fused - ref)))
    assert jnp.allclose(out_unfused, ref, rtol=2e-2, atol=2e-2), \
        float(jnp.max(jnp.abs(out_unfused - ref)))

    print("KERNEL_OK")
</pallas_src>

<mosaic_0001>
module attributes {stable_mosaic.version = 11 : i64} {
  func.func @_fused_kernel(%arg0: i32, %arg1: memref<128x36xbf16, #tpu.memory_space<vmem>>, %arg2: memref<36x32xbf16, #tpu.memory_space<vmem>>, %arg3: memref<1x32xf32, #tpu.memory_space<vmem>>, %arg4: memref<128x32xf32, #tpu.memory_space<vmem>>) attributes {dimension_semantics = [#tpu.dimension_semantics<parallel>], iteration_bounds = array<i64: 1>, scalar_prefetch = 0 : i64, scratch_operands = 0 : i64, tpu.core_type = #tpu.core_type<tc>, window_params = [{transform_indices = @transform_0, window_bounds = array<i64: 128, 36>}, {pipeline_mode = #tpu.pipeline_mode<synchronous>, transform_indices = @transform_1, window_bounds = array<i64: 36, 32>}, {pipeline_mode = #tpu.pipeline_mode<synchronous>, transform_indices = @transform_2, window_bounds = array<i64: 1, 32>}, {transform_indices = @transform_3, window_bounds = array<i64: 128, 32>}]} {
    %c0 = arith.constant 0 : index
    %c0_0 = arith.constant 0 : index
    %0 = vector.load %arg1[%c0, %c0_0] : memref<128x36xbf16, #tpu.memory_space<vmem>>, vector<128x36xbf16>
    %c0_1 = arith.constant 0 : index
    %c0_2 = arith.constant 0 : index
    %1 = vector.load %arg2[%c0_1, %c0_2] : memref<36x32xbf16, #tpu.memory_space<vmem>>, vector<36x32xbf16>
    %cst = arith.constant dense<0.000000e+00> : vector<128x32xf32>
    %2 = tpu.matmul %0, %1, %cst {dimension_numbers = #tpu.dot_dimension_numbers<[1], [0], [0], [1], [0, 0, 1, 1], [], []>} : vector<128x36xbf16>, vector<36x32xbf16>, vector<128x32xf32> -> vector<128x32xf32>
    %c0_3 = arith.constant 0 : index
    %c0_4 = arith.constant 0 : index
    %3 = vector.load %arg3[%c0_3, %c0_4] : memref<1x32xf32, #tpu.memory_space<vmem>>, vector<1x32xf32>
    %4 = vector.broadcast %3 : vector<1x32xf32> to vector<128x32xf32>
    %5 = arith.addf %2, %4 : vector<128x32xf32>
    %c0_5 = arith.constant 0 : index
    %c0_6 = arith.constant 0 : index
    %6 = vector.load %arg4[%c0_5, %c0_6] : memref<128x32xf32, #tpu.memory_space<vmem>>, vector<128x32xf32>
    tpu.vector_store %arg4[%c0_5, %c0_6], %5 {strides = array<i32>} : memref<128x32xf32, #tpu.memory_space<vmem>>, vector<128x32xf32>,
    return
  }
  func.func @transform_0(%arg0: i32) -> (i32, i32) {
    %c0_i32 = arith.constant 0 : i32
    %c0_i32_0 = arith.constant 0 : i32
    return %arg0, %c0_i32 : i32, i32
  }
  func.func @transform_1(%arg0: i32) -> (i32, i32) {
    %c0_i32 = arith.constant 0 : i32
    %c0_i32_0 = arith.constant 0 : i32
    %c0_i32_1 = arith.constant 0 : i32
    return %c0_i32, %c0_i32_0 : i32, i32
  }
  func.func @transform_2(%arg0: i32) -> (i32, i32) {
    %c0_i32 = arith.constant 0 : i32
    %c0_i32_0 = arith.constant 0 : i32
    %c0_i32_1 = arith.constant 0 : i32
    return %c0_i32, %c0_i32_0 : i32, i32
  }
  func.func @transform_3(%arg0: i32) -> (i32, i32) {
    %c0_i32 = arith.constant 0 : i32
    %c0_i32_0 = arith.constant 0 : i32
    return %arg0, %c0_i32 : i32, i32
  }
}

</mosaic_0001>

<llo_original>
// kernel: hybrid_embed_forward.1
$region0: #{hybrid_embed_forward.1}
  #allocation0 [shape = 'u32[]', space=smem, size = 0x4, offset = 0x4, fixed_abs, tag = 'smem constant byte address 0x4 - core index']
  #allocation1 [shape = 'u32[144,128]{1,0:T(1,128)}', space=vmem, size = 0x12000, scoped, tag = 'internal scratch']
  %s0 = inlined_call_operand.vmem [shape: bf16[128,36], index: 0, kind: input, shape index: {}]
  %s1 = inlined_call_operand.vmem [shape: bf16[36,32], index: 1, kind: input, shape index: {}]
  %s2 = inlined_call_operand.vmem [shape: f32[1,32], index: 2, kind: input, shape index: {}]
  %s3 = inlined_call_operand.vmem [shape: f32[128,32], index: 3, kind: output, shape index: {}]
  %s4 = sld [smem:[#allocation0]]
  $region22: #{hybrid_embed_forward.1} parent=0
    _
  %s6 = ssub.s32 1, %s4
  %s7 = scalar_select 0, %s6, %s4
  // Predicated region
  $region2: #{hybrid_embed_forward.1} parent=0 // pred_check
    _
  $region3: #{hybrid_embed_forward.1} parent=0 // pred_check_branch
    %9 = sbr.rel (0) target = $region5
  $region4: #{hybrid_embed_forward.1} parent=0 // pred_region
    _
  $region5: #{hybrid_embed_forward.1} parent=0 // pred_fallthru
    _
  // Predicated region
  $region6: #{hybrid_embed_forward.1} parent=0 // pred_check
    _
  $region7: #{hybrid_embed_forward.1} parent=0 // pred_check_branch
    %11 = sbr.rel (0) target = $region9
  $region8: #{hybrid_embed_forward.1} parent=0 // pred_region
    _
  $region9: #{hybrid_embed_forward.1} parent=0 // pred_fallthru
    _
  // Predicated region
  $region10: #{hybrid_embed_forward.1} parent=0 // pred_check
    _
  $region11: #{hybrid_embed_forward.1} parent=0 // pred_check_branch
    %13 = sbr.rel (0) target = $region13
  $region12: #{hybrid_embed_forward.1} parent=0 // pred_region
    _
  $region13: #{hybrid_embed_forward.1} parent=0 // pred_fallthru
    _
  %v15 = vld [vmem:[%s0] sm:$0xf]
  %v16 = vld [vmem:[%s0 + $0x4] sm:$0xf]
  %v17 = vld [vmem:[%s0 + $0x8] sm:$0xf]
  %v18 = vld [vmem:[%s0 + $0xc] sm:$0xf]
  %v19 = vld [vmem:[%s0 + $0x10] sm:$0xf]
  %v20 = vld [vmem:[%s0 + $0x14] sm:$0xf]
  %v21 = vld [vmem:[%s0 + $0x18] sm:$0xf]
  %v22 = vld [vmem:[%s0 + $0x1c] sm:$0xf]
  %v23 = vld [vmem:[%s0 + $0x20] sm:$0xf]
  %v24 = vld [vmem:[%s0 + $0x24] sm:$0xf]
  %v25 = vld [vmem:[%s0 + $0x28] sm:$0xf]
  %v26 = vld [vmem:[%s0 + $0x2c] sm:$0xf]
  %v27 = vld [vmem:[%s0 + $0x30] sm:$0xf]
  %v28 = vld [vmem:[%s0 + $0x34] sm:$0xf]
  %v29 = vld [vmem:[%s0 + $0x38] sm:$0xf]
  %v30 = vld [vmem:[%s0 + $0x3c] sm:$0xf]
  %v31 = vld [vmem:[%s1] sm:$0xf]
  %v32 = vld [vmem:[%s1 + $0x4] sm:$0xf]
  %v33 = vld [vmem:[%s1 + $0x8] sm:$0xf]
  %v34 = vld [vmem:[%s1 + $0xc] sm:$0xf]
  %v35 = vld [vmem:[%s1 + $0x10] sm:$0x3]
  %v36 = vld [vmem:[%s2] sm:$0x1]
  %v38 = vlaneseq
  %v39 = vshrl.u32 %v38, 7
  %v40 = vsub.s32 0, %v39
  %v41 = vrot.slane %v36, %v40
  %v59 = vunpack.c.l.b16 %v15
  %v60 = vunpack.c.l.b16 %v16
  %v61 = vunpack.c.l.b16 %v17
  %v62 = vunpack.c.l.b16 %v18
  %v63 = vunpack.c.l.b16 %v19
  %v64 = vunpack.c.l.b16 %v20
  %v65 = vunpack.c.l.b16 %v21
  %v66 = vunpack.c.l.b16 %v22
  %v67 = vunpack.c.l.b16 %v23
  %v68 = vunpack.c.l.b16 %v24
  %v69 = vunpack.c.l.b16 %v25
  %v70 = vunpack.c.l.b16 %v26
  %v71 = vunpack.c.l.b16 %v27
  %v72 = vunpack.c.l.b16 %v28
  %v73 = vunpack.c.l.b16 %v29
  %v74 = vunpack.c.l.b16 %v30
  %v75 = vpack.c.b16 %v60, %v59
  %v76 = vpack.c.b16 %v62, %v61
  %v77 = vpack.c.b16 %v64, %v63
  %v78 = vpack.c.b16 %v66, %v65
  %v79 = vpack.c.b16 %v68, %v67
  %v80 = vpack.c.b16 %v70, %v69
  %v81 = vpack.c.b16 %v72, %v71
  %v82 = vpack.c.b16 %v74, %v73
  %v88 = vunpack.c.l.b16 %v31
  %v89 = vunpack.c.l.b16 %v32
  %v90 = vunpack.c.l.b16 %v33
  %v91 = vunpack.c.l.b16 %v34
  %v92 = vunpack.c.l.b16 %v35
  %v93 = vpack.c.b16 %v89, %v88
  %v94 = vpack.c.b16 %v91, %v90
  %v95 = vpack.c.b16 %v92, %v92
  %vm98 = vcmask 293888
  %v100 = vsel %vm98, %v75, 0
  %v103 = vsel %vm98, %v76, 0
  %v106 = vsel %vm98, %v77, 0
  %v109 = vsel %vm98, %v78, 0
  %v112 = vsel %vm98, %v79, 0
  %v115 = vsel %vm98, %v80, 0
  %v118 = vsel %vm98, %v81, 0
  %v121 = vsel %vm98, %v82, 0
  %vm123 = vcmask 1041408
  %v125 = vsel %vm123, %v95, 0
  %127 = vmatprep.subr.bf16.mxu0 0
  %128 = vmatpush1.bf16.msra.mxu0 %v93
  %129 = vmatprep.subr.bf16.mxu0 0
  %130 = vmatpush1.bf16.msra.mxu0 %v94
  %131 = vmatprep.subr.bf16.mxu0 0
  %132 = vmatpush1.bf16.msra.mxu0 %v125
  %133 = vmatprep.subr.bf16.mxu0 0
  %134 = vmatpush1.bf16.msra.mxu0 0
  %135 = vmatprep.subr.bf16.mxu0 0
  %136 = vmatpush1.bf16.msra.mxu0 0
  %137 = vmatprep.subr.bf16.mxu0 0
  %138 = vmatpush1.bf16.msra.mxu0 0
  %139 = vmatprep.subr.bf16.mxu0 0
  %140 = vmatpush1.bf16.msra.mxu0 0
  %141 = vmatprep.subr.bf16.mxu0 0
  %142 = vmatpush1.bf16.msra.mxu0 0
  %143 = vmatprep.subr.bf16.mxu0 0
  %144 = vmatpush1.bf16.msra.mxu0 0
  %145 = vmatprep.subr.bf16.mxu0 0
  %146 = vmatpush1.bf16.msra.mxu0 0
  %147 = vmatprep.subr.bf16.mxu0 0
  %148 = vmatpush1.bf16.msra.mxu0 0
  %149 = vmatprep.subr.bf16.mxu0 0
  %150 = vmatpush1.bf16.msra.mxu0 0
  %151 = vmatprep.subr.bf16.mxu0 0
  %152 = vmatpush1.bf16.msra.mxu0 0
  %153 = vmatprep.subr.bf16.mxu0 0
  %154 = vmatpush1.bf16.msra.mxu0 0
  %155 = vmatprep.subr.bf16.mxu0 0
  %156 = vmatpush1.bf16.msra.mxu0 0
  %157 = vmatprep.subr.bf16.mxu0 0
  %158 = vmatpush1.bf16.msra.mxu0 0
  %159 = vmatprep.mubr.bf16.mxu0 0
  %160 = vmatmul.mubr.bf16.gmra.mrb[0].mxu0 %v100
  %v161 = vpop.f32.mrb[0].mxu0
  %v162 = vadd.f32 %v41, %v161
  %v163 = vpop.f32.mrb[0].mxu0
  %v164 = vpop.f32.mrb[0].mxu0
  %v165 = vadd.f32 %v41, %v164
  %v166 = vpop.f32.mrb[0].mxu0
  %167 = vmatprep.mubr.bf16.mxu0 0
  %168 = vmatmul.mubr.bf16.gmra.mrb[0].mxu0 %v103
  %v169 = vpop.f32.mrb[0].mxu0
  %v170 = vadd.f32 %v41, %v169
  %v171 = vpop.f32.mrb[0].mxu0
  %v172 = vpop.f32.mrb[0].mxu0
  %v173 = vadd.f32 %v41, %v172
  %v174 = vpop.f32.mrb[0].mxu0
  %175 = vmatprep.mubr.bf16.mxu0 0
  %176 = vmatmul.mubr.bf16.gmra.mrb[0].mxu0 %v106
  %v177 = vpop.f32.mrb[0].mxu0
  %v178 = vadd.f32 %v41, %v177
  %v179 = vpop.f32.mrb[0].mxu0
  %v180 = vpop.f32.mrb[0].mxu0
  %v181 = vadd.f32 %v41, %v180
  %v182 = vpop.f32.mrb[0].mxu0
  %183 = vmatprep.mubr.bf16.mxu0 0
  %184 = vmatmul.mubr.bf16.gmra.mrb[0].mxu0 %v109
  %v185 = vpop.f32.mrb[0].mxu0
  %v186 = vadd.f32 %v41, %v185
  %v187 = vpop.f32.mrb[0].mxu0
  %v188 = vpop.f32.mrb[0].mxu0
  %v189 = vadd.f32 %v41, %v188
  %v190 = vpop.f32.mrb[0].mxu0
  %191 = vmatprep.mubr.bf16.mxu0 0
  %192 = vmatmul.mubr.bf16.gmra.mrb[0].mxu0 %v112
  %v193 = vpop.f32.mrb[0].mxu0
  %v194 = vadd.f32 %v41, %v193
  %v195 = vpop.f32.mrb[0].mxu0
  %v196 = vpop.f32.mrb[0].mxu0
  %v197 = vadd.f32 %v41, %v196
  %v198 = vpop.f32.mrb[0].mxu0
  %199 = vmatprep.mubr.bf16.mxu0 0
  %200 = vmatmul.mubr.bf16.gmra.mrb[0].mxu0 %v115
  %v201 = vpop.f32.mrb[0].mxu0
  %v202 = vadd.f32 %v41, %v201
  %v203 = vpop.f32.mrb[0].mxu0
  %v204 = vpop.f32.mrb[0].mxu0
  %v205 = vadd.f32 %v41, %v204
  %v206 = vpop.f32.mrb[0].mxu0
  %207 = vmatprep.mubr.bf16.mxu0 0
  %208 = vmatmul.mubr.bf16.gmra.mrb[0].mxu0 %v118
  %v209 = vpop.f32.mrb[0].mxu0
  %v210 = vadd.f32 %v41, %v209
  %v211 = vpop.f32.mrb[0].mxu0
  %v212 = vpop.f32.mrb[0].mxu0
  %v213 = vadd.f32 %v41, %v212
  %v214 = vpop.f32.mrb[0].mxu0
  %215 = vmatprep.mubr.bf16.mxu0 0
  %216 = vmatmul.mubr.bf16.gmra.mrb[0].mxu0 %v121
  %v217 = vpop.f32.mrb[0].mxu0
  %v218 = vadd.f32 %v41, %v217
  %v219 = vpop.f32.mrb[0].mxu0
  %v220 = vpop.f32.mrb[0].mxu0
  %v221 = vadd.f32 %v41, %v220
  %v222 = vpop.f32.mrb[0].mxu0
  %223 = vdwg.mxu0
  %vm224 = vcmask 261120
  %225 = vst.msk [vmem:[%s3] sm:$0xff] %vm224, %v162
  %226 = vst.msk [vmem:[%s3 + $0x8] sm:$0xff] %vm224, %v165
  %227 = vst.msk [vmem:[%s3 + $0x10] sm:$0xff] %vm224, %v170
  %228 = vst.msk [vmem:[%s3 + $0x18] sm:$0xff] %vm224, %v173
  %229 = vst.msk [vmem:[%s3 + $0x20] sm:$0xff] %vm224, %v178
  %230 = vst.msk [vmem:[%s3 + $0x28] sm:$0xff] %vm224, %v181
  %231 = vst.msk [vmem:[%s3 + $0x30] sm:$0xff] %vm224, %v186
  %232 = vst.msk [vmem:[%s3 + $0x38] sm:$0xff] %vm224, %v189
  %233 = vst.msk [vmem:[%s3 + $0x40] sm:$0xff] %vm224, %v194
  %234 = vst.msk [vmem:[%s3 + $0x48] sm:$0xff] %vm224, %v197
  %235 = vst.msk [vmem:[%s3 + $0x50] sm:$0xff] %vm224, %v202
  %236 = vst.msk [vmem:[%s3 + $0x58] sm:$0xff] %vm224, %v205
  %237 = vst.msk [vmem:[%s3 + $0x60] sm:$0xff] %vm224, %v210
  %238 = vst.msk [vmem:[%s3 + $0x68] sm:$0xff] %vm224, %v213
  %239 = vst.msk [vmem:[%s3 + $0x70] sm:$0xff] %vm224, %v218
  %240 = vst.msk [vmem:[%s3 + $0x78] sm:$0xff] %vm224, %v221
  // Predicated region
  $region14: #{hybrid_embed_forward.1} parent=0 // pred_check
    _
  $region15: #{hybrid_embed_forward.1} parent=0 // pred_check_branch
    %242 = sbr.rel (0) target = $region17
  $region16: #{hybrid_embed_forward.1} parent=0 // pred_region
    _
  $region17: #{hybrid_embed_forward.1} parent=0 // pred_fallthru
    _
  // Predicated region
  $region18: #{hybrid_embed_forward.1} parent=0 // pred_check
    _
  $region19: #{hybrid_embed_forward.1} parent=0 // pred_check_branch
    %244 = sbr.rel (0) target = $region21
  $region20: #{hybrid_embed_forward.1} parent=0 // pred_region
    _
  $region21: #{hybrid_embed_forward.1} parent=0 // pred_fallthru
    _

</llo_original>
